<compile_context>
chip_gen: v7x
topology: tpu7x:2x2x1
jax: 0.10.0
libtpu: 0.0.40
codegen_flags: <defaults>
</compile_context>

<pallas_src>
import functools

import jax
import jax.numpy as jnp
from jax.experimental import pallas as pl
from jax.experimental.pallas import tpu as pltpu


# ---------------------------------------------------------------------------
# Hardware queries (defensive: fall back to conservative v7x numbers).
# ---------------------------------------------------------------------------
def _vmem_capacity_bytes():
    try:
        info = pltpu.get_tpu_info()
        for attr in ("vmem_capacity_bytes", "vmem_size_bytes", "vmem_bytes"):
            v = getattr(info, attr, None)
            if v:
                return int(v)
    except Exception:
        pass
    return 64 << 20  # v7x per-TC VMEM (smallest across v5e/v6e/v7x)


def _num_tensorcores():
    try:
        info = pltpu.get_tpu_info()
        for attr in ("num_cores", "num_tensorcores", "core_count"):
            v = getattr(info, attr, None)
            if v:
                return int(v)
    except Exception:
        pass
    return 2  # assume v7x (2 TCs); extra grid steps are harmless elsewhere


# ---------------------------------------------------------------------------
# VMEM usage estimates (double-buffered in+out blocks + f32 temporaries).
# ---------------------------------------------------------------------------
def _flat_vmem_usage(bc, flat_len, itemsize):
    io = 2 * 2 * bc * flat_len * itemsize      # in + out, each double-buffered
    tmp = 6 * bc * flat_len * 4                # f32 / i32 temporaries
    return io + tmp


def _rows_vmem_usage(th, w, itemsize):
    io = 2 * 2 * th * w * itemsize             # center in + out, double-buffered
    halo = 2 * 2 * 8 * w * itemsize            # two 8-row halo blocks, dbl-buffered
    tmp = 6 * th * w * 4 + 8 * 8 * w * 4       # f32 temporaries
    return io + halo + tmp


def _concat_vmem_usage(bc, h, w, itemsize):
    return 2 * 2 * bc * h * w * itemsize + 6 * bc * (h + 2) * (w + 2) * 4


def _vmem_limit_bytes(usage, cap):
    hard = max(cap - (8 << 20), 32 << 20)
    want = max(32 << 20, 2 * usage + (8 << 20))   # generous headroom over estimate
    return int(min(want, hard))


# ---------------------------------------------------------------------------
# Block-size selection.
# ---------------------------------------------------------------------------
def _pick_block_channels_flat(nc, flat_len, itemsize, num_tc, budget):
    """Channel-block size for the flattened path.

    Block second-minor dim must be a multiple of 8 or equal the full dim.
    Prefer >= 4*num_tc steps (even count) once blocks are >= 512 KiB.
    """
    cands = [d for d in range(1, nc + 1)
             if nc % d == 0 and (d % 8 == 0 or d == nc)]
    fits = [d for d in cands if _flat_vmem_usage(d, flat_len, itemsize) <= budget]
    if not fits:
        return None
    target_steps = 4 * num_tc
    good = [d for d in fits
            if nc // d >= target_steps and d * flat_len * itemsize >= (512 << 10)]
    if good:
        even = [d for d in good if (nc // d) % 2 == 0]
        return max(even) if even else max(good)
    return max(fits)


def _pick_row_tile(h, w, itemsize, budget):
    """Row-tile height (multiple of 8, divides h) for the spatially tiled path."""
    best = None
    for th in range(8, h + 1, 8):
        if h % th:
            continue
        if _rows_vmem_usage(th, w, itemsize) <= budget and th * w * itemsize <= (2 << 20):
            best = th
    return best or 8


def _pick_block_channels_concat(nc, h, w, itemsize, budget):
    best = 1
    for d in range(1, nc + 1):
        if nc % d:
            continue
        if _concat_vmem_usage(d, h, w, itemsize) <= budget:
            best = d
    return best


# ---------------------------------------------------------------------------
# Kernels.
# ---------------------------------------------------------------------------
def _gauss_flat_kernel(x_ref, o_ref, *, h, w):
    """Blur on a (Bc, H*W) block: each row is one flattened channel image.

    Shifted neighbors are built with pltpu.roll along the flattened lane axis
    (+-1 for horizontal taps, +-W for vertical taps); wrap-around contributions
    are zeroed with iota-based boundary masks (fused zero padding).
    """
    bc, flat_len = o_ref.shape
    x = x_ref[...].astype(jnp.float32)

    lane = jax.lax.broadcasted_iota(jnp.int32, (bc, flat_len), 1)
    if (w & (w - 1)) == 0:
        col = jnp.bitwise_and(lane, w - 1)
    else:
        col = lane % w

    # Horizontal pass: [1, 2, 1] / 4 with zero padding at row ends.
    left = jnp.where(col == 0, 0.0, pltpu.roll(x, shift=1, axis=1))
    right = jnp.where(col == w - 1, 0.0, pltpu.roll(x, shift=flat_len - 1, axis=1))
    t = 0.25 * ((left + right) + (x + x))

    # Vertical pass: [1, 2, 1] / 4 with zero padding at image top / bottom.
    up = jnp.where(lane < w, 0.0, pltpu.roll(t, shift=w, axis=1))
    down = jnp.where(lane >= (h - 1) * w, 0.0,
                     pltpu.roll(t, shift=flat_len - w, axis=1))
    y = 0.25 * ((up + down) + (t + t))

    o_ref[...] = y.astype(o_ref.dtype)


def _gauss_rows_kernel(xc_ref, xu_ref, xd_ref, o_ref):
    """Blur on a (1, TH, W) row tile of one channel image (large-image path).

    xu_ref / xd_ref are the 8-row blocks just above / below the tile (clamped
    at image edges by the index maps); only their boundary row is used and it
    is gated to zero at the image top / bottom.
    """
    _, th, w = o_ref.shape
    r = pl.program_id(1)
    last = pl.num_programs(1) - 1

    def hpass(v):  # horizontal [1,2,1]/4 with zero padding at col 0 / W-1
        col = jax.lax.broadcasted_iota(jnp.int32, v.shape, 2)
        left = jnp.where(col == 0, 0.0, pltpu.roll(v, shift=1, axis=2))
        right = jnp.where(col == w - 1, 0.0, pltpu.roll(v, shift=w - 1, axis=2))
        return 0.25 * ((left + right) + (v + v))

    tc = hpass(xc_ref[...].astype(jnp.float32))              # (1, TH, W)
    up_row = hpass(xu_ref[:, 7:8, :].astype(jnp.float32))    # (1, 1, W)
    dn_row = hpass(xd_ref[:, 0:1, :].astype(jnp.float32))    # (1, 1, W)

    up_row = up_row * (r > 0).astype(jnp.float32)            # zero pad at top
    dn_row = dn_row * (r < last).astype(jnp.float32)         # zero pad at bottom

    up = jnp.concatenate([up_row, tc[:, :th - 1, :]], axis=1)  # neighbor above
    dn = jnp.concatenate([tc[:, 1:, :], dn_row], axis=1)       # neighbor below
    y = 0.25 * ((up + dn) + (tc + tc))

    o_ref[...] = y.astype(o_ref.dtype)


def _gauss_concat_kernel(x_ref, o_ref):
    """Compatibility path for odd shapes: (Bc, H, W) block, concat-based halo."""
    bc, hh, ww = o_ref.shape
    x = x_ref[...].astype(jnp.float32)

    zc = jnp.zeros((bc, hh, 1), jnp.float32)
    xh = jnp.concatenate([zc, x, zc], axis=2)
    mid = xh[:, :, 1:ww + 1]
    t = 0.25 * ((xh[:, :, 0:ww] + xh[:, :, 2:ww + 2]) + (mid + mid))

    zr = jnp.zeros((bc, 1, ww), jnp.float32)
    tv = jnp.concatenate([zr, t, zr], axis=1)
    midv = tv[:, 1:hh + 1, :]
    y = 0.25 * ((tv[:, 0:hh, :] + tv[:, 2:hh + 2, :]) + (midv + midv))

    o_ref[...] = y.astype(o_ref.dtype)


# ---------------------------------------------------------------------------
# Wrapper.
# ---------------------------------------------------------------------------
def gauss_filter(x, *, _force_path=None, _force_th=None):
    """x: (N, C, H, W). Depthwise 3x3 Gaussian blur with zero padding = 1.

    Matches nn.Conv2d(3, 3, 3, padding=1, groups=3, bias=False) with the fixed
    GaussFilter taps (to within f32 rounding of the direct 9-tap sum).
    """
    n, c, h, w = x.shape
    nc = n * c
    itemsize = x.dtype.itemsize
    cap = _vmem_capacity_bytes()
    budget = min(cap // 3, 48 << 20)
    num_tc = _num_tensorcores()

    cost = pl.CostEstimate(
        flops=10 * nc * h * w,                         # two separable 3-tap passes
        transcendentals=0,
        bytes_accessed=2 * nc * h * w * itemsize,
    )

    path = _force_path
    bc = None
    if path is None:
        if (h * w) % 128 == 0:
            bc = _pick_block_channels_flat(nc, h * w, itemsize, num_tc, budget)
            if bc is not None:
                path = "flat"
        if path is None and h % 8 == 0 and w % 128 == 0:
            path = "rows"       # spatial tiling: image too big for VMEM (v7x)
        if path is None:
            path = "concat"     # last-resort compatibility path

    if path == "flat":
        flat_len = h * w
        if bc is None:
            bc = _pick_block_channels_flat(nc, flat_len, itemsize, num_tc, budget) or nc
        xf = x.reshape(nc, flat_len)
        limit = _vmem_limit_bytes(_flat_vmem_usage(bc, flat_len, itemsize), cap)
        out = pl.pallas_call(
            functools.partial(_gauss_flat_kernel, h=h, w=w),
            out_shape=jax.ShapeDtypeStruct((nc, flat_len), x.dtype),
            grid_spec=pltpu.PrefetchScalarGridSpec(
                num_scalar_prefetch=0,
                grid=(nc // bc,),
                in_specs=[pl.BlockSpec((bc, flat_len), lambda i: (i, 0))],
                out_specs=pl.BlockSpec((bc, flat_len), lambda i: (i, 0)),
            ),
            compiler_params=pltpu.CompilerParams(
                dimension_semantics=("parallel",),
                vmem_limit_bytes=limit),
            cost_estimate=cost,
        )(xf)
        return out.reshape(n, c, h, w)

    if path == "rows":
        assert h % 8 == 0 and w % 128 == 0, "row-tiled path needs aligned H, W"
        th = _force_th or _pick_row_tile(h, w, itemsize, budget)
        assert h % th == 0 and th % 8 == 0
        rb = th // 8                      # 8-row blocks per tile
        hb = h // 8                       # total 8-row blocks
        xr = x.reshape(nc, h, w)
        limit = _vmem_limit_bytes(_rows_vmem_usage(th, w, itemsize), cap)

        def center_map(ci, ri):
            return (ci, ri, 0)

        def up_map(ci, ri):               # 8-row block containing row ri*th - 1
            return (ci, jnp.maximum(ri * rb - 1, 0), 0)

        def dn_map(ci, ri):               # 8-row block containing row (ri+1)*th
            return (ci, jnp.minimum((ri + 1) * rb, hb - 1), 0)

        out = pl.pallas_call(
            _gauss_rows_kernel,
            out_shape=jax.ShapeDtypeStruct((nc, h, w), x.dtype),
            grid_spec=pltpu.PrefetchScalarGridSpec(
                num_scalar_prefetch=0,
                grid=(nc, h // th),
                in_specs=[pl.BlockSpec((1, th, w), center_map),
                          pl.BlockSpec((1, 8, w), up_map),
                          pl.BlockSpec((1, 8, w), dn_map)],
                out_specs=pl.BlockSpec((1, th, w), center_map),
            ),
            compiler_params=pltpu.CompilerParams(
                dimension_semantics=("parallel", "parallel"),
                vmem_limit_bytes=limit),
            cost_estimate=cost,
        )(xr, xr, xr)
        return out.reshape(n, c, h, w)

    # "concat" compatibility path (arbitrary shapes).
    bc = _pick_block_channels_concat(nc, h, w, itemsize, budget)
    xf = x.reshape(nc, h, w)
    limit = _vmem_limit_bytes(_concat_vmem_usage(bc, h, w, itemsize), cap)
    out = pl.pallas_call(
        _gauss_concat_kernel,
        out_shape=jax.ShapeDtypeStruct((nc, h, w), x.dtype),
        grid_spec=pltpu.PrefetchScalarGridSpec(
            num_scalar_prefetch=0,
            grid=(nc // bc,),
            in_specs=[pl.BlockSpec((bc, h, w), lambda i: (i, 0, 0))],
            out_specs=pl.BlockSpec((bc, h, w), lambda i: (i, 0, 0)),
        ),
        compiler_params=pltpu.CompilerParams(
            dimension_semantics=("parallel",),
            vmem_limit_bytes=limit),
        cost_estimate=cost,
    )(xf)
    return out.reshape(n, c, h, w)


# ---------------------------------------------------------------------------
# Self-test.
# ---------------------------------------------------------------------------
if __name__ == "__main__":
    def reference(x):
        _, _, hh, ww = x.shape
        taps = [[0.0625, 0.125, 0.0625],
                [0.125, 0.25, 0.125],
                [0.0625, 0.125, 0.0625]]
        xp = jnp.pad(x, ((0, 0), (0, 0), (1, 1), (1, 1)))
        r = jnp.zeros_like(x)
        for dy in range(3):
            for dx in range(3):
                r = r + taps[dy][dx] * xp[:, :, dy:dy + hh, dx:dx + ww]
        return r

    key = jax.random.PRNGKey(0)
    k1, k2 = jax.random.split(key)

    # Main case (matches the module: 3 input channels, groups=3).
    x = jax.random.normal(k1, (2, 3, 16, 16), dtype=jnp.float32)
    y = jax.block_until_ready(gauss_filter(x))
    assert jnp.allclose(y, reference(x), atol=1e-5), "flat path mismatch"

    # Exercise the row-tiled (large-image / v7x) path, including the halo
    # exchange between adjacent row tiles, on an aligned small shape.
    x2 = jax.random.normal(k2, (1, 3, 16, 128), dtype=jnp.float32)
    y2 = jax.block_until_ready(gauss_filter(x2, _force_path="rows", _force_th=8))
    assert jnp.allclose(y2, reference(x2), atol=1e-5), "rows path mismatch"

    print("KERNEL_OK")
</pallas_src>

<mosaic_0001>
module attributes {stable_mosaic.version = 11 : i64} {
  func.func @_gauss_flat_kernel(%arg0: i32, %arg1: memref<6x256xf32, #tpu.memory_space<vmem>>, %arg2: memref<6x256xf32, #tpu.memory_space<vmem>>) attributes {dimension_semantics = [#tpu.dimension_semantics<parallel>], iteration_bounds = array<i64: 1>, scalar_prefetch = 0 : i64, scratch_operands = 0 : i64, tpu.core_type = #tpu.core_type<tc>, window_params = [{transform_indices = @transform_0, window_bounds = array<i64: 6, 256>}, {transform_indices = @transform_1, window_bounds = array<i64: 6, 256>}]} {
    %c0 = arith.constant 0 : index
    %c0_0 = arith.constant 0 : index
    %0 = vector.load %arg1[%c0, %c0_0] : memref<6x256xf32, #tpu.memory_space<vmem>>, vector<6x256xf32>
    %1 = tpu.iota {dimensions = array<i32: 1>} : vector<6x256xi32>
    %c15_i32 = arith.constant 15 : i32
    %2 = vector.broadcast %c15_i32 : i32 to vector<6x256xi32>
    %3 = arith.andi %1, %2 : vector<6x256xi32>
    %c0_i32 = arith.constant 0 : i32
    %4 = vector.broadcast %c0_i32 : i32 to vector<6x256xi32>
    %5 = arith.cmpi eq, %3, %4 : vector<6x256xi32>
    %c1_i32 = arith.constant 1 : i32
    %6 = tpu.dynamic_rotate %0 by %c1_i32 dim 1 : vector<6x256xf32>, i32 -> vector<6x256xf32>
    %cst = arith.constant 0.000000e+00 : f32
    %7 = vector.broadcast %cst : f32 to vector<6x256xf32>
    %8 = arith.select %5, %7, %6 : vector<6x256xi1>, vector<6x256xf32>
    %c15_i32_1 = arith.constant 15 : i32
    %9 = vector.broadcast %c15_i32_1 : i32 to vector<6x256xi32>
    %10 = arith.cmpi eq, %3, %9 : vector<6x256xi32>
    %c255_i32 = arith.constant 255 : i32
    %11 = tpu.dynamic_rotate %0 by %c255_i32 dim 1 : vector<6x256xf32>, i32 -> vector<6x256xf32>
    %cst_2 = arith.constant 0.000000e+00 : f32
    %12 = vector.broadcast %cst_2 : f32 to vector<6x256xf32>
    %13 = arith.select %10, %12, %11 : vector<6x256xi1>, vector<6x256xf32>
    %14 = arith.addf %8, %13 : vector<6x256xf32>
    %15 = arith.addf %0, %0 : vector<6x256xf32>
    %16 = arith.addf %14, %15 : vector<6x256xf32>
    %cst_3 = arith.constant 2.500000e-01 : f32
    %17 = vector.broadcast %cst_3 : f32 to vector<6x256xf32>
    %18 = arith.mulf %17, %16 : vector<6x256xf32>
    %c16_i32 = arith.constant 16 : i32
    %19 = vector.broadcast %c16_i32 : i32 to vector<6x256xi32>
    %20 = arith.cmpi slt, %1, %19 : vector<6x256xi32>
    %c16_i32_4 = arith.constant 16 : i32
    %21 = tpu.dynamic_rotate %18 by %c16_i32_4 dim 1 : vector<6x256xf32>, i32 -> vector<6x256xf32>
    %cst_5 = arith.constant 0.000000e+00 : f32
    %22 = vector.broadcast %cst_5 : f32 to vector<6x256xf32>
    %23 = arith.select %20, %22, %21 : vector<6x256xi1>, vector<6x256xf32>
    %c240_i32 = arith.constant 240 : i32
    %24 = vector.broadcast %c240_i32 : i32 to vector<6x256xi32>
    %25 = arith.cmpi sge, %1, %24 : vector<6x256xi32>
    %c240_i32_6 = arith.constant 240 : i32
    %26 = tpu.dynamic_rotate %18 by %c240_i32_6 dim 1 : vector<6x256xf32>, i32 -> vector<6x256xf32>
    %cst_7 = arith.constant 0.000000e+00 : f32
    %27 = vector.broadcast %cst_7 : f32 to vector<6x256xf32>
    %28 = arith.select %25, %27, %26 : vector<6x256xi1>, vector<6x256xf32>
    %29 = arith.addf %23, %28 : vector<6x256xf32>
    %30 = arith.addf %18, %18 : vector<6x256xf32>
    %31 = arith.addf %29, %30 : vector<6x256xf32>
    %cst_8 = arith.constant 2.500000e-01 : f32
    %32 = vector.broadcast %cst_8 : f32 to vector<6x256xf32>
    %33 = arith.mulf %32, %31 : vector<6x256xf32>
    %c0_9 = arith.constant 0 : index
    %c0_10 = arith.constant 0 : index
    %34 = vector.load %arg2[%c0_9, %c0_10] : memref<6x256xf32, #tpu.memory_space<vmem>>, vector<6x256xf32>
    tpu.vector_store %arg2[%c0_9, %c0_10], %33 {strides = array<i32>} : memref<6x256xf32, #tpu.memory_space<vmem>>, vector<6x256xf32>,
    return
  }
  func.func @transform_0(%arg0: i32) -> (i32, i32) {
    %c0_i32 = arith.constant 0 : i32
    %c0_i32_0 = arith.constant 0 : i32
    return %arg0, %c0_i32 : i32, i32
  }
  func.func @transform_1(%arg0: i32) -> (i32, i32) {
    %c0_i32 = arith.constant 0 : i32
    %c0_i32_0 = arith.constant 0 : i32
    return %arg0, %c0_i32 : i32, i32
  }
}

</mosaic_0001>

<llo_original>
// kernel: tpu_custom_call.1
$region0: #{tpu_custom_call.1}
  #allocation0 [shape = 'u32[]', space=smem, size = 0x4, offset = 0x4, fixed_abs, tag = 'smem constant byte address 0x4 - core index']
  #allocation1 [shape = 'u32[144,128]{1,0:T(1,128)}', space=vmem, size = 0x12000, scoped, tag = 'internal scratch']
  %s0 = inlined_call_operand.hbm [shape: f32[6,256], index: 0, kind: input, shape index: {}]
  %s1 = inlined_call_operand.hbm [shape: f32[6,256], index: 1, kind: output, shape index: {}]
  %s2 = sld [smem:[#allocation0]]
  $region18: #{tpu_custom_call.1} parent=0
    _
  %s4 = ssub.s32 1, %s2
  %s5 = scalar_select 0, %s4, %s2
  $region1: #{tpu_custom_call.1} parent=0
    #allocation2 [shape = 'u8[8192]{0}', space=vmem, size = 0x2000, scoped, tag = 'input window, operand 0, single buffered']
    #allocation3 [shape = 's32[1]{0}', space=sflag, size = 0x4, scoped, tag = 'scoped memory for tpu_custom_call.1']
    #allocation4 [shape = 's32[1]{0}', space=sflag, size = 0x4, scoped, tag = 'scoped memory for tpu_custom_call.1']
    #allocation5 [shape = 'u8[8192]{0}', space=vmem, size = 0x2000, scoped, tag = 'output window, operand 0, single buffered']
    %6 = vsyncpa [#allocation3], 0
    %7 = vsyncpa [#allocation4], 0
    // Predicated region
    $region2: #{tpu_custom_call.1} parent=1 // pred_check
      _
    $region3: #{tpu_custom_call.1} parent=1 // pred_check_branch
      %9 = sbr.rel (0) target = $region5
    $region4: #{tpu_custom_call.1} parent=1 // pred_region
      %s11 = ssub.s32 256, 256
      %12 = vsyncadd [#allocation3], %s11
      %s14 = sshll.u32 [#allocation2], 4
      %s15 = int_to_ptr.vmem [resolvable:$true] %s14
      %17 = dma.hbm_to_vmem [thread:$0]  %s0, 256, %s15, [#allocation3]
    $region5: #{tpu_custom_call.1} parent=1 // pred_fallthru
      _
    // Predicated region
    $region6: #{tpu_custom_call.1} parent=1 // pred_check
      _
    $region7: #{tpu_custom_call.1} parent=1 // pred_check_branch
      %19 = sbr.rel (0) target = $region9
    $region8: #{tpu_custom_call.1} parent=1 // pred_region
      %20 = dma.done [#allocation3], 256
    $region9: #{tpu_custom_call.1} parent=1 // pred_fallthru
      _
    %v21 = vld [vmem:[#allocation2] sm:$0x3f]
    %v22 = vld [vmem:[#allocation2 + $0x8] sm:$0x3f]
    %v23 = vlaneseq
    %v24 = vand.u32 %v23, 127
    %v25 = vadd.s32 %v24, 128
    %v26 = vand.u32 %v24, 15
    %v27 = vand.u32 %v25, 15
    %vm28 = vcmp.eq.s32.totalorder %v26, 0
    %vm29 = vcmp.eq.s32.totalorder %v27, 0
    %30 = vrot.lane.b32.xlu0 %v21, 1
    %v31 = vpop.permute.xlu0 %30
    %32 = vrot.lane.b32.xlu0 %v22, 1
    %v33 = vpop.permute.xlu0 %32
    %vm34 = vcmp.lt.s32.totalorder %v24, 1
    %v35 = vsel %vm34, %v31, %v33
    %v36 = vsel %vm34, %v33, %v31
    %v37 = vsel %vm28, 0.0, %v36
    %v38 = vsel %vm29, 0.0, %v35
    %vm39 = vcmp.eq.s32.totalorder %v26, 15
    %vm40 = vcmp.eq.s32.totalorder %v27, 15
    %41 = vrot.lane.b32.xlu0 %v21, 127
    %v42 = vpop.permute.xlu0 %41
    %43 = vrot.lane.b32.xlu0 %v22, 127
    %v44 = vpop.permute.xlu0 %43
    %vm45 = vcmp.lt.s32.totalorder %v24, 127
    %v46 = vsel %vm45, %v42, %v44
    %v47 = vsel %vm45, %v44, %v42
    %v48 = vsel %vm39, 0.0, %v46
    %v49 = vsel %vm40, 0.0, %v47
    %v50 = vadd.f32 %v37, %v48
    %v51 = vadd.f32 %v38, %v49
    %v52 = vadd.f32 %v21, %v21
    %v53 = vadd.f32 %v22, %v22
    %v54 = vadd.f32 %v50, %v52
    %v55 = vadd.f32 %v51, %v53
    %v56 = vmul.f32 %v54, 0.25
    %v57 = vmul.f32 %v55, 0.25
    %vm58 = vcmp.lt.s32.totalorder %v24, 16
    %vm59 = vcmp.lt.s32.totalorder %v25, 16
    %60 = vrot.lane.b32.xlu0 %v56, 16
    %v61 = vpop.permute.xlu0 %60
    %62 = vrot.lane.b32.xlu0 %v57, 16
    %v63 = vpop.permute.xlu0 %62
    %v64 = vsel %vm58, %v61, %v63
    %v65 = vsel %vm58, %v63, %v61
    %v66 = vsel %vm58, 0.0, %v65
    %v67 = vsel %vm59, 0.0, %v64
    %vm68 = vcmp.ge.s32.totalorder %v24, 240
    %vm69 = vcmp.ge.s32.totalorder %v25, 240
    %70 = vrot.lane.b32.xlu0 %v56, 112
    %v71 = vpop.permute.xlu0 %70
    %72 = vrot.lane.b32.xlu0 %v57, 112
    %v73 = vpop.permute.xlu0 %72
    %vm74 = vcmp.lt.s32.totalorder %v24, 112
    %v75 = vsel %vm74, %v71, %v73
    %v76 = vsel %vm74, %v73, %v71
    %v77 = vsel %vm68, 0.0, %v75
    %v78 = vsel %vm69, 0.0, %v76
    %v79 = vadd.f32 %v66, %v77
    %v80 = vadd.f32 %v67, %v78
    %v81 = vadd.f32 %v56, %v56
    %v82 = vadd.f32 %v57, %v57
    %v83 = vadd.f32 %v79, %v81
    %v84 = vadd.f32 %v80, %v82
    %v85 = vmul.f32 %v83, 0.25
    %v86 = vmul.f32 %v84, 0.25
    %87 = vst [vmem:[#allocation5] sm:$0x3f] %v85
    %88 = vst [vmem:[#allocation5 + $0x8] sm:$0x3f] %v86
    // Predicated region
    $region10: #{tpu_custom_call.1} parent=1 // pred_check
      _
    $region11: #{tpu_custom_call.1} parent=1 // pred_check_branch
      %90 = sbr.rel (0) target = $region13
    $region12: #{tpu_custom_call.1} parent=1 // pred_region
      %s92 = ssub.s32 256, 256
      %93 = vsyncadd [#allocation4], %s92
      %s95 = sshll.u32 [#allocation5], 4
      %s96 = int_to_ptr.vmem [resolvable:$true] %s95
      %98 = dma.vmem_to_hbm [thread:$0]  %s96, 256, %s1, [#allocation4]
    $region13: #{tpu_custom_call.1} parent=1 // pred_fallthru
      _
    // Predicated region
    $region14: #{tpu_custom_call.1} parent=1 // pred_check
      _
    $region15: #{tpu_custom_call.1} parent=1 // pred_check_branch
      %100 = sbr.rel (0) target = $region17
    $region16: #{tpu_custom_call.1} parent=1 // pred_region
      %101 = dma.done [#allocation4], 256
    $region17: #{tpu_custom_call.1} parent=1 // pred_fallthru
      _
    %102 = vsyncpa [#allocation3], 1
    %103 = vsyncpa [#allocation4], 1

</llo_original>
